<compile_context>
chip_gen: v7x
topology: tpu7x:2x2x1
jax: 0.10.0
libtpu: 0.0.40
codegen_flags: <defaults>
</compile_context>

<pallas_src>
import functools

import jax
import jax.numpy as jnp
from jax.experimental import pallas as pl
from jax.experimental.pallas import tpu as pltpu

EPS = 1e-5
HIDDEN = [512, 256, 128, 64, 32]   # fc1..fc5 widths; fc6 -> 1
LANE = 128
SUBLANE = 8


def _round_up(x, m):
    return (x + m - 1) // m * m


# ---------------------------------------------------------------------------
# Kernel
# ---------------------------------------------------------------------------
def mlp_kernel(x_ref,
               w1, b1, w2, b2, w3, b3, w4, b4, w5, b5, w6, b6,
               o_ref, *, matmul_dtype):
    """Fused 6-layer MLP. BN (eval) pre-folded into W/b; dropout = identity."""

    def layer(h, w_r, b_r, relu=True):
        y = jnp.dot(h.astype(matmul_dtype), w_r[...],
                    preferred_element_type=jnp.float32)
        y = y + b_r[...]                       # bias (+ folded BN) in f32 (VPU)
        return jnp.maximum(y, 0.0) if relu else y

    h = x_ref[...].astype(jnp.float32)
    h = layer(h, w1, b1)
    h = layer(h, w2, b2)
    h = layer(h, w3, b3)
    h = layer(h, w4, b4)
    h = layer(h, w5, b5)
    out = layer(h, w6, b6, relu=False)
    o_ref[...] = out.astype(o_ref.dtype)


# ---------------------------------------------------------------------------
# Parameter packing: fold BatchNorm, zero-pad to lane-dense widths
# ---------------------------------------------------------------------------
def _pack_params(params, input_dim, matmul_dtype):
    dims_in = [input_dim] + HIDDEN
    dims_out = HIDDEN + [1]
    packed = []
    for i, (din, dout) in enumerate(zip(dims_in, dims_out), start=1):
        w = params[f"w{i}"]
        b = params[f"b{i}"]
        if i <= 5:  # fold eval-mode BatchNorm1d into the linear layer
            scale = params[f"gamma{i}"] * jax.lax.rsqrt(params[f"var{i}"] + EPS)
            shift = params[f"beta{i}"] - params[f"mean{i}"] * scale
            w = w * scale[None, :]
            b = b * scale + shift
        din_p = _round_up(din, LANE)
        dout_p = _round_up(dout, LANE)
        w_p = jnp.zeros((din_p, dout_p), jnp.float32).at[:din, :dout].set(w)
        b_p = jnp.zeros((1, dout_p), jnp.float32).at[0, :dout].set(b)
        packed.append(w_p.astype(matmul_dtype))   # matmul operand dtype
        packed.append(b_p)                        # bias add stays f32
    return packed


# ---------------------------------------------------------------------------
# Wrapper
# ---------------------------------------------------------------------------
def regression_nn_price_forward(x, params, *, matmul_dtype=jnp.float32,
                                block_m=256):
    """x: (B, input_dim) float32. Returns (B, 1) float32."""
    B, input_dim = x.shape
    in_pad = _round_up(input_dim, LANE)
    out_pad = LANE                       # fc6 output padded 1 -> 128 (lane-dense)

    tm = block_m if B >= block_m else _round_up(B, SUBLANE)
    b_pad = _round_up(B, tm)

    x_p = jnp.zeros((b_pad, in_pad), matmul_dtype)
    x_p = x_p.at[:B, :input_dim].set(x.astype(matmul_dtype))

    weights = _pack_params(params, input_dim, matmul_dtype)

    grid = (b_pad // tm,)
    x_spec = pl.BlockSpec((tm, in_pad), lambda i: (i, 0))
    # Weights/biases: full array, constant block index -> resident across steps.
    w_specs = [pl.BlockSpec(a.shape, lambda i: (0, 0)) for a in weights]
    out_spec = pl.BlockSpec((tm, out_pad), lambda i: (i, 0))

    dims_in = [in_pad, 512, 256, 128, 128, 128]
    dims_out = [512, 256, 128, 128, 128, 128]
    flops = 2 * b_pad * sum(di * do for di, do in zip(dims_in, dims_out))
    bytes_accessed = (x_p.size * x_p.dtype.itemsize
                      + sum(a.size * a.dtype.itemsize for a in weights)
                      + b_pad * out_pad * 4)
    cost = pl.CostEstimate(flops=flops, transcendentals=0,
                           bytes_accessed=bytes_accessed)

    fn = pl.pallas_call(
        functools.partial(mlp_kernel, matmul_dtype=matmul_dtype),
        out_shape=jax.ShapeDtypeStruct((b_pad, out_pad), jnp.float32),
        grid=grid,
        in_specs=[x_spec] + w_specs,
        out_specs=out_spec,
        compiler_params=pltpu.CompilerParams(
            dimension_semantics=("parallel",),
            vmem_limit_bytes=32 * 1024 * 1024),
        cost_estimate=cost,
    )
    out = fn(x_p, *weights)
    return out[:B, :1]


# ---------------------------------------------------------------------------
# Init + pure-JAX reference (PyTorch semantics)
# ---------------------------------------------------------------------------
def init_params(key, input_dim):
    """PyTorch-default-style init (uniform +-1/sqrt(fan_in)); fresh BN stats."""
    params = {}
    dims_in = [input_dim] + HIDDEN
    dims_out = HIDDEN + [1]
    keys = jax.random.split(key, 12)
    for i, (din, dout) in enumerate(zip(dims_in, dims_out), start=1):
        bound = 1.0 / jnp.sqrt(float(din))
        kw, kb = keys[2 * (i - 1)], keys[2 * (i - 1) + 1]
        params[f"w{i}"] = jax.random.uniform(
            kw, (din, dout), jnp.float32, minval=-bound, maxval=bound)
        params[f"b{i}"] = jax.random.uniform(
            kb, (dout,), jnp.float32, minval=-bound, maxval=bound)
        if i <= 5:
            params[f"gamma{i}"] = jnp.ones((dout,), jnp.float32)
            params[f"beta{i}"] = jnp.zeros((dout,), jnp.float32)
            params[f"mean{i}"] = jnp.zeros((dout,), jnp.float32)
            params[f"var{i}"] = jnp.ones((dout,), jnp.float32)
    return params


def reference_forward(x, params):
    h = x
    for i in range(1, 6):
        h = h @ params[f"w{i}"] + params[f"b{i}"]
        scale = params[f"gamma{i}"] * jax.lax.rsqrt(params[f"var{i}"] + EPS)
        shift = params[f"beta{i}"] - params[f"mean{i}"] * scale
        h = jnp.maximum(h * scale + shift, 0.0)
    return h @ params["w6"] + params["b6"]


if __name__ == "__main__":
    key = jax.random.PRNGKey(0)
    k_param, k_x = jax.random.split(key)

    batch, input_dim = 8, 32
    params = init_params(k_param, input_dim)
    x = jax.random.normal(k_x, (batch, input_dim), jnp.float32)

    # f32 path: strict check against the pure-JAX reference.
    out = regression_nn_price_forward(x, params, matmul_dtype=jnp.float32)
    out = jax.block_until_ready(out)
    ref = reference_forward(x, params)
    assert out.shape == (batch, 1)
    assert jnp.allclose(out, ref, atol=5e-4, rtol=5e-4), (out, ref)

    # bf16-operand path (f32 accumulation): compile/run + loose sanity check.
    out_bf16 = regression_nn_price_forward(x, params, matmul_dtype=jnp.bfloat16)
    out_bf16 = jax.block_until_ready(out_bf16)
    assert out_bf16.shape == (batch, 1)
    assert bool(jnp.all(jnp.isfinite(out_bf16)))

    print("KERNEL_OK")
</pallas_src>

<mosaic_0001>
module attributes {stable_mosaic.version = 11 : i64} {
  func.func @mlp_kernel(%arg0: i32, %arg1: memref<8x128xf32, #tpu.memory_space<vmem>>, %arg2: memref<128x512xf32, #tpu.memory_space<vmem>>, %arg3: memref<1x512xf32, #tpu.memory_space<vmem>>, %arg4: memref<512x256xf32, #tpu.memory_space<vmem>>, %arg5: memref<1x256xf32, #tpu.memory_space<vmem>>, %arg6: memref<256x128xf32, #tpu.memory_space<vmem>>, %arg7: memref<1x128xf32, #tpu.memory_space<vmem>>, %arg8: memref<128x128xf32, #tpu.memory_space<vmem>>, %arg9: memref<1x128xf32, #tpu.memory_space<vmem>>, %arg10: memref<128x128xf32, #tpu.memory_space<vmem>>, %arg11: memref<1x128xf32, #tpu.memory_space<vmem>>, %arg12: memref<128x128xf32, #tpu.memory_space<vmem>>, %arg13: memref<1x128xf32, #tpu.memory_space<vmem>>, %arg14: memref<8x128xf32, #tpu.memory_space<vmem>>) attributes {dimension_semantics = [#tpu.dimension_semantics<parallel>], iteration_bounds = array<i64: 1>, scalar_prefetch = 0 : i64, scratch_operands = 0 : i64, tpu.core_type = #tpu.core_type<tc>, window_params = [{transform_indices = @transform_0, window_bounds = array<i64: 8, 128>}, {pipeline_mode = #tpu.pipeline_mode<synchronous>, transform_indices = @transform_1, window_bounds = array<i64: 128, 512>}, {pipeline_mode = #tpu.pipeline_mode<synchronous>, transform_indices = @transform_2, window_bounds = array<i64: 1, 512>}, {pipeline_mode = #tpu.pipeline_mode<synchronous>, transform_indices = @transform_3, window_bounds = array<i64: 512, 256>}, {pipeline_mode = #tpu.pipeline_mode<synchronous>, transform_indices = @transform_4, window_bounds = array<i64: 1, 256>}, {pipeline_mode = #tpu.pipeline_mode<synchronous>, transform_indices = @transform_5, window_bounds = array<i64: 256, 128>}, {pipeline_mode = #tpu.pipeline_mode<synchronous>, transform_indices = @transform_6, window_bounds = array<i64: 1, 128>}, {pipeline_mode = #tpu.pipeline_mode<synchronous>, transform_indices = @transform_7, window_bounds = array<i64: 128, 128>}, {pipeline_mode = #tpu.pipeline_mode<synchronous>, transform_indices = @transform_8, window_bounds = array<i64: 1, 128>}, {pipeline_mode = #tpu.pipeline_mode<synchronous>, transform_indices = @transform_9, window_bounds = array<i64: 128, 128>}, {pipeline_mode = #tpu.pipeline_mode<synchronous>, transform_indices = @transform_10, window_bounds = array<i64: 1, 128>}, {pipeline_mode = #tpu.pipeline_mode<synchronous>, transform_indices = @transform_11, window_bounds = array<i64: 128, 128>}, {pipeline_mode = #tpu.pipeline_mode<synchronous>, transform_indices = @transform_12, window_bounds = array<i64: 1, 128>}, {transform_indices = @transform_13, window_bounds = array<i64: 8, 128>}]} {
    %c0 = arith.constant 0 : index
    %c0_0 = arith.constant 0 : index
    %0 = vector.load %arg1[%c0, %c0_0] : memref<8x128xf32, #tpu.memory_space<vmem>>, vector<8x128xf32>
    %c0_1 = arith.constant 0 : index
    %c0_2 = arith.constant 0 : index
    %1 = vector.load %arg2[%c0_1, %c0_2] : memref<128x512xf32, #tpu.memory_space<vmem>>, vector<128x512xf32>
    %cst = arith.constant dense<0.000000e+00> : vector<8x512xf32>
    %2 = tpu.matmul %0, %1, %cst {dimension_numbers = #tpu.dot_dimension_numbers<[1], [0], [0], [1], [0, 0, 1, 1], [], []>} : vector<8x128xf32>, vector<128x512xf32>, vector<8x512xf32> -> vector<8x512xf32>
    %c0_3 = arith.constant 0 : index
    %c0_4 = arith.constant 0 : index
    %3 = vector.load %arg3[%c0_3, %c0_4] : memref<1x512xf32, #tpu.memory_space<vmem>>, vector<1x512xf32>
    %4 = vector.broadcast %3 : vector<1x512xf32> to vector<8x512xf32>
    %5 = arith.addf %2, %4 : vector<8x512xf32>
    %cst_5 = arith.constant 0.000000e+00 : f32
    %6 = vector.broadcast %cst_5 : f32 to vector<8x512xf32>
    %7 = arith.maximumf %5, %6 : vector<8x512xf32>
    %c0_6 = arith.constant 0 : index
    %c0_7 = arith.constant 0 : index
    %8 = vector.load %arg4[%c0_6, %c0_7] : memref<512x256xf32, #tpu.memory_space<vmem>>, vector<512x256xf32>
    %cst_8 = arith.constant dense<0.000000e+00> : vector<8x256xf32>
    %9 = tpu.matmul %7, %8, %cst_8 {dimension_numbers = #tpu.dot_dimension_numbers<[1], [0], [0], [1], [0, 0, 1, 1], [], []>} : vector<8x512xf32>, vector<512x256xf32>, vector<8x256xf32> -> vector<8x256xf32>
    %c0_9 = arith.constant 0 : index
    %c0_10 = arith.constant 0 : index
    %10 = vector.load %arg5[%c0_9, %c0_10] : memref<1x256xf32, #tpu.memory_space<vmem>>, vector<1x256xf32>
    %11 = vector.broadcast %10 : vector<1x256xf32> to vector<8x256xf32>
    %12 = arith.addf %9, %11 : vector<8x256xf32>
    %cst_11 = arith.constant 0.000000e+00 : f32
    %13 = vector.broadcast %cst_11 : f32 to vector<8x256xf32>
    %14 = arith.maximumf %12, %13 : vector<8x256xf32>
    %c0_12 = arith.constant 0 : index
    %c0_13 = arith.constant 0 : index
    %15 = vector.load %arg6[%c0_12, %c0_13] : memref<256x128xf32, #tpu.memory_space<vmem>>, vector<256x128xf32>
    %cst_14 = arith.constant dense<0.000000e+00> : vector<8x128xf32>
    %16 = tpu.matmul %14, %15, %cst_14 {dimension_numbers = #tpu.dot_dimension_numbers<[1], [0], [0], [1], [0, 0, 1, 1], [], []>} : vector<8x256xf32>, vector<256x128xf32>, vector<8x128xf32> -> vector<8x128xf32>
    %c0_15 = arith.constant 0 : index
    %c0_16 = arith.constant 0 : index
    %17 = vector.load %arg7[%c0_15, %c0_16] : memref<1x128xf32, #tpu.memory_space<vmem>>, vector<1x128xf32>
    %18 = vector.broadcast %17 : vector<1x128xf32> to vector<8x128xf32>
    %19 = arith.addf %16, %18 : vector<8x128xf32>
    %cst_17 = arith.constant 0.000000e+00 : f32
    %20 = vector.broadcast %cst_17 : f32 to vector<8x128xf32>
    %21 = arith.maximumf %19, %20 : vector<8x128xf32>
    %c0_18 = arith.constant 0 : index
    %c0_19 = arith.constant 0 : index
    %22 = vector.load %arg8[%c0_18, %c0_19] : memref<128x128xf32, #tpu.memory_space<vmem>>, vector<128x128xf32>
    %cst_20 = arith.constant dense<0.000000e+00> : vector<8x128xf32>
    %23 = tpu.matmul %21, %22, %cst_20 {dimension_numbers = #tpu.dot_dimension_numbers<[1], [0], [0], [1], [0, 0, 1, 1], [], []>} : vector<8x128xf32>, vector<128x128xf32>, vector<8x128xf32> -> vector<8x128xf32>
    %c0_21 = arith.constant 0 : index
    %c0_22 = arith.constant 0 : index
    %24 = vector.load %arg9[%c0_21, %c0_22] : memref<1x128xf32, #tpu.memory_space<vmem>>, vector<1x128xf32>
    %25 = vector.broadcast %24 : vector<1x128xf32> to vector<8x128xf32>
    %26 = arith.addf %23, %25 : vector<8x128xf32>
    %cst_23 = arith.constant 0.000000e+00 : f32
    %27 = vector.broadcast %cst_23 : f32 to vector<8x128xf32>
    %28 = arith.maximumf %26, %27 : vector<8x128xf32>
    %c0_24 = arith.constant 0 : index
    %c0_25 = arith.constant 0 : index
    %29 = vector.load %arg10[%c0_24, %c0_25] : memref<128x128xf32, #tpu.memory_space<vmem>>, vector<128x128xf32>
    %cst_26 = arith.constant dense<0.000000e+00> : vector<8x128xf32>
    %30 = tpu.matmul %28, %29, %cst_26 {dimension_numbers = #tpu.dot_dimension_numbers<[1], [0], [0], [1], [0, 0, 1, 1], [], []>} : vector<8x128xf32>, vector<128x128xf32>, vector<8x128xf32> -> vector<8x128xf32>
    %c0_27 = arith.constant 0 : index
    %c0_28 = arith.constant 0 : index
    %31 = vector.load %arg11[%c0_27, %c0_28] : memref<1x128xf32, #tpu.memory_space<vmem>>, vector<1x128xf32>
    %32 = vector.broadcast %31 : vector<1x128xf32> to vector<8x128xf32>
    %33 = arith.addf %30, %32 : vector<8x128xf32>
    %cst_29 = arith.constant 0.000000e+00 : f32
    %34 = vector.broadcast %cst_29 : f32 to vector<8x128xf32>
    %35 = arith.maximumf %33, %34 : vector<8x128xf32>
    %c0_30 = arith.constant 0 : index
    %c0_31 = arith.constant 0 : index
    %36 = vector.load %arg12[%c0_30, %c0_31] : memref<128x128xf32, #tpu.memory_space<vmem>>, vector<128x128xf32>
    %cst_32 = arith.constant dense<0.000000e+00> : vector<8x128xf32>
    %37 = tpu.matmul %35, %36, %cst_32 {dimension_numbers = #tpu.dot_dimension_numbers<[1], [0], [0], [1], [0, 0, 1, 1], [], []>} : vector<8x128xf32>, vector<128x128xf32>, vector<8x128xf32> -> vector<8x128xf32>
    %c0_33 = arith.constant 0 : index
    %c0_34 = arith.constant 0 : index
    %38 = vector.load %arg13[%c0_33, %c0_34] : memref<1x128xf32, #tpu.memory_space<vmem>>, vector<1x128xf32>
    %39 = vector.broadcast %38 : vector<1x128xf32> to vector<8x128xf32>
    %40 = arith.addf %37, %39 : vector<8x128xf32>
    %c0_35 = arith.constant 0 : index
    %c0_36 = arith.constant 0 : index
    %41 = vector.load %arg14[%c0_35, %c0_36] : memref<8x128xf32, #tpu.memory_space<vmem>>, vector<8x128xf32>
    tpu.vector_store %arg14[%c0_35, %c0_36], %40 {strides = array<i32>} : memref<8x128xf32, #tpu.memory_space<vmem>>, vector<8x128xf32>,
    return
  }
  func.func @transform_0(%arg0: i32) -> (i32, i32) {
    %c0_i32 = arith.constant 0 : i32
    %c0_i32_0 = arith.constant 0 : i32
    return %arg0, %c0_i32 : i32, i32
  }
  func.func @transform_1(%arg0: i32) -> (i32, i32) {
    %c0_i32 = arith.constant 0 : i32
    %c0_i32_0 = arith.constant 0 : i32
    %c0_i32_1 = arith.constant 0 : i32
    return %c0_i32, %c0_i32_0 : i32, i32
  }
  func.func @transform_2(%arg0: i32) -> (i32, i32) {
    %c0_i32 = arith.constant 0 : i32
    %c0_i32_0 = arith.constant 0 : i32
    %c0_i32_1 = arith.constant 0 : i32
    return %c0_i32, %c0_i32_0 : i32, i32
  }
  func.func @transform_3(%arg0: i32) -> (i32, i32) {
    %c0_i32 = arith.constant 0 : i32
    %c0_i32_0 = arith.constant 0 : i32
    %c0_i32_1 = arith.constant 0 : i32
    return %c0_i32, %c0_i32_0 : i32, i32
  }
  func.func @transform_4(%arg0: i32) -> (i32, i32) {
    %c0_i32 = arith.constant 0 : i32
    %c0_i32_0 = arith.constant 0 : i32
    %c0_i32_1 = arith.constant 0 : i32
    return %c0_i32, %c0_i32_0 : i32, i32
  }
  func.func @transform_5(%arg0: i32) -> (i32, i32) {
    %c0_i32 = arith.constant 0 : i32
    %c0_i32_0 = arith.constant 0 : i32
    %c0_i32_1 = arith.constant 0 : i32
    return %c0_i32, %c0_i32_0 : i32, i32
  }
  func.func @transform_6(%arg0: i32) -> (i32, i32) {
    %c0_i32 = arith.constant 0 : i32
    %c0_i32_0 = arith.constant 0 : i32
    %c0_i32_1 = arith.constant 0 : i32
    return %c0_i32, %c0_i32_0 : i32, i32
  }
  func.func @transform_7(%arg0: i32) -> (i32, i32) {
    %c0_i32 = arith.constant 0 : i32
    %c0_i32_0 = arith.constant 0 : i32
    %c0_i32_1 = arith.constant 0 : i32
    return %c0_i32, %c0_i32_0 : i32, i32
  }
  func.func @transform_8(%arg0: i32) -> (i32, i32) {
    %c0_i32 = arith.constant 0 : i32
    %c0_i32_0 = arith.constant 0 : i32
    %c0_i32_1 = arith.constant 0 : i32
    return %c0_i32, %c0_i32_0 : i32, i32
  }
  func.func @transform_9(%arg0: i32) -> (i32, i32) {
    %c0_i32 = arith.constant 0 : i32
    %c0_i32_0 = arith.constant 0 : i32
    %c0_i32_1 = arith.constant 0 : i32
    return %c0_i32, %c0_i32_0 : i32, i32
  }
  func.func @transform_10(%arg0: i32) -> (i32, i32) {
    %c0_i32 = arith.constant 0 : i32
    %c0_i32_0 = arith.constant 0 : i32
    %c0_i32_1 = arith.constant 0 : i32
    return %c0_i32, %c0_i32_0 : i32, i32
  }
  func.func @transform_11(%arg0: i32) -> (i32, i32) {
    %c0_i32 = arith.constant 0 : i32
    %c0_i32_0 = arith.constant 0 : i32
    %c0_i32_1 = arith.constant 0 : i32
    return %c0_i32, %c0_i32_0 : i32, i32
  }
  func.func @transform_12(%arg0: i32) -> (i32, i32) {
    %c0_i32 = arith.constant 0 : i32
    %c0_i32_0 = arith.constant 0 : i32
    %c0_i32_1 = arith.constant 0 : i32
    return %c0_i32, %c0_i32_0 : i32, i32
  }
  func.func @transform_13(%arg0: i32) -> (i32, i32) {
    %c0_i32 = arith.constant 0 : i32
    %c0_i32_0 = arith.constant 0 : i32
    return %arg0, %c0_i32 : i32, i32
  }
}

</mosaic_0001>

<llo_original>
// kernel: tpu_custom_call.1
$region0: #{tpu_custom_call.1}
  #allocation0 [shape = 'u32[]', space=smem, size = 0x4, offset = 0x4, fixed_abs, tag = 'smem constant byte address 0x4 - core index']
  #allocation1 [shape = 'u32[144,128]{1,0:T(1,128)}', space=vmem, size = 0x12000, scoped, tag = 'internal scratch']
  %s0 = inlined_call_operand.hbm [shape: f32[8,128], index: 0, kind: input, shape index: {}]
  %s1 = inlined_call_operand.hbm [shape: f32[128,512], index: 1, kind: input, shape index: {}]
  %s2 = inlined_call_operand.vmem [shape: f32[1,512], index: 2, kind: input, shape index: {}]
  %s3 = inlined_call_operand.hbm [shape: f32[512,256], index: 3, kind: input, shape index: {}]
  %s4 = inlined_call_operand.vmem [shape: f32[1,256], index: 4, kind: input, shape index: {}]
  %s5 = inlined_call_operand.hbm [shape: f32[256,128], index: 5, kind: input, shape index: {}]
  %s6 = inlined_call_operand.vmem [shape: f32[1,128], index: 6, kind: input, shape index: {}]
  %s7 = inlined_call_operand.hbm [shape: f32[128,128], index: 7, kind: input, shape index: {}]
  %s8 = inlined_call_operand.vmem [shape: f32[1,128], index: 8, kind: input, shape index: {}]
  %s9 = inlined_call_operand.hbm [shape: f32[128,128], index: 9, kind: input, shape index: {}]
  %s10 = inlined_call_operand.vmem [shape: f32[1,128], index: 10, kind: input, shape index: {}]
  %s11 = inlined_call_operand.hbm [shape: f32[128,128], index: 11, kind: input, shape index: {}]
  %s12 = inlined_call_operand.vmem [shape: f32[1,128], index: 12, kind: input, shape index: {}]
  %s13 = inlined_call_operand.hbm [shape: f32[8,128], index: 13, kind: output, shape index: {}]
  %s14 = sld [smem:[#allocation0]]
  $region90: #{tpu_custom_call.1} parent=0
    _
  %s16 = ssub.s32 1, %s14
  %s17 = scalar_select 0, %s16, %s14
  $region1: #{tpu_custom_call.1} parent=0
    #allocation2 [shape = 'u8[4096]{0}', space=vmem, size = 0x1000, scoped, tag = 'input window, operand 0, single buffered']
    #allocation3 [shape = 's32[1]{0}', space=sflag, size = 0x4, scoped, tag = 'scoped memory for tpu_custom_call.1']
    #allocation4 [shape = 's32[1]{0}', space=sflag, size = 0x4, scoped, tag = 'scoped memory for tpu_custom_call.1']
    #allocation5 [shape = 'u8[262144]{0}', space=vmem, size = 0x40000, scoped, tag = 'input window, operand 1, single buffered']
    #allocation6 [shape = 's32[1]{0}', space=sflag, size = 0x4, scoped, tag = 'scoped memory for tpu_custom_call.1']
    #allocation7 [shape = 'u8[524288]{0}', space=vmem, size = 0x80000, scoped, tag = 'input window, operand 3, single buffered']
    #allocation8 [shape = 'u8[131072]{0}', space=vmem, size = 0x20000, scoped, tag = 'input window, operand 5, single buffered']
    #allocation9 [shape = 's32[1]{0}', space=sflag, size = 0x4, scoped, tag = 'scoped memory for tpu_custom_call.1']
    #allocation10 [shape = 'u8[65536]{0}', space=vmem, size = 0x10000, scoped, tag = 'input window, operand 7, single buffered']
    #allocation11 [shape = 'u8[65536]{0}', space=vmem, size = 0x10000, scoped, tag = 'input window, operand 9, single buffered']
    #allocation12 [shape = 's32[1]{0}', space=sflag, size = 0x4, scoped, tag = 'scoped memory for tpu_custom_call.1']
    #allocation13 [shape = 'u8[65536]{0}', space=vmem, size = 0x10000, scoped, tag = 'input window, operand 11, single buffered']
    #allocation14 [shape = 'u8[4096]{0}', space=vmem, size = 0x1000, scoped, tag = 'output window, operand 0, single buffered']
    %18 = vsyncpa [#allocation3], 0
    %19 = vsyncpa [#allocation6], 0
    %20 = vsyncpa [#allocation9], 0
    %21 = vsyncpa [#allocation12], 0
    %22 = vsyncpa [#allocation4], 0
    // Predicated region
    $region2: #{tpu_custom_call.1} parent=1 // pred_check
      _
    $region3: #{tpu_custom_call.1} parent=1 // pred_check_branch
      %24 = sbr.rel (0) target = $region5
    $region4: #{tpu_custom_call.1} parent=1 // pred_region
      %s26 = ssub.s32 128, 128
      %27 = vsyncadd [#allocation3], %s26
      %s29 = sshll.u32 [#allocation2], 4
      %s30 = int_to_ptr.vmem [resolvable:$true] %s29
      %32 = dma.hbm_to_vmem [thread:$0]  %s0, 128, %s30, [#allocation3]
    $region5: #{tpu_custom_call.1} parent=1 // pred_fallthru
      _
    // Predicated region
    $region6: #{tpu_custom_call.1} parent=1 // pred_check
      _
    $region7: #{tpu_custom_call.1} parent=1 // pred_check_branch
      %34 = sbr.rel (0) target = $region9
    $region8: #{tpu_custom_call.1} parent=1 // pred_region
      %s36 = ssub.s32 8192, 8192
      %37 = vsyncadd [#allocation6], %s36
      %s38 = sshll.u32 [#allocation5], 4
      %s39 = int_to_ptr.vmem [resolvable:$true] %s38
      %44 = dma.hbm_to_vmem [thread:$0]  %s1, 8192, %s39, [#allocation6], 512, 512, 32
    $region9: #{tpu_custom_call.1} parent=1 // pred_fallthru
      _
    // Predicated region
    $region10: #{tpu_custom_call.1} parent=1 // pred_check
      _
    $region11: #{tpu_custom_call.1} parent=1 // pred_check_branch
      %46 = sbr.rel (0) target = $region13
    $region12: #{tpu_custom_call.1} parent=1 // pred_region
      _
    $region13: #{tpu_custom_call.1} parent=1 // pred_fallthru
      _
    // Predicated region
    $region14: #{tpu_custom_call.1} parent=1 // pred_check
      _
    $region15: #{tpu_custom_call.1} parent=1 // pred_check_branch
      %48 = sbr.rel (0) target = $region17
    $region16: #{tpu_custom_call.1} parent=1 // pred_region
      %s50 = ssub.s32 16384, 16384
      %51 = vsyncadd [#allocation6], %s50
      %s52 = sshll.u32 [#allocation7], 4
      %s53 = int_to_ptr.vmem [resolvable:$true] %s52
      %58 = dma.hbm_to_vmem [thread:$0]  %s3, 16384, %s53, [#allocation6], 256, 256, 16
    $region17: #{tpu_custom_call.1} parent=1 // pred_fallthru
      _
    // Predicated region
    $region18: #{tpu_custom_call.1} parent=1 // pred_check
      _
    $region19: #{tpu_custom_call.1} parent=1 // pred_check_branch
      %60 = sbr.rel (0) target = $region21
    $region20: #{tpu_custom_call.1} parent=1 // pred_region
      _
    $region21: #{tpu_custom_call.1} parent=1 // pred_fallthru
      _
    // Predicated region
    $region22: #{tpu_custom_call.1} parent=1 // pred_check
      _
    $region23: #{tpu_custom_call.1} parent=1 // pred_check_branch
      %62 = sbr.rel (0) target = $region25
    $region24: #{tpu_custom_call.1} parent=1 // pred_region
      %s64 = ssub.s32 4096, 4096
      %65 = vsyncadd [#allocation9], %s64
      %s66 = sshll.u32 [#allocation8], 4
      %s67 = int_to_ptr.vmem [resolvable:$true] %s66
      %72 = dma.hbm_to_vmem [thread:$0]  %s5, 4096, %s67, [#allocation9], 128, 128, 8
    $region25: #{tpu_custom_call.1} parent=1 // pred_fallthru
      _
    // Predicated region
    $region26: #{tpu_custom_call.1} parent=1 // pred_check
      _
    $region27: #{tpu_custom_call.1} parent=1 // pred_check_branch
      %74 = sbr.rel (0) target = $region29
    $region28: #{tpu_custom_call.1} parent=1 // pred_region
      _
    $region29: #{tpu_custom_call.1} parent=1 // pred_fallthru
      _
    // Predicated region
    $region30: #{tpu_custom_call.1} parent=1 // pred_check
      _
    $region31: #{tpu_custom_call.1} parent=1 // pred_check_branch
      %76 = sbr.rel (0) target = $region33
    $region32: #{tpu_custom_call.1} parent=1 // pred_region
      %s78 = ssub.s32 2048, 2048
      %79 = vsyncadd [#allocation9], %s78
      %s80 = sshll.u32 [#allocation10], 4
      %s81 = int_to_ptr.vmem [resolvable:$true] %s80
      %86 = dma.hbm_to_vmem [thread:$0]  %s7, 2048, %s81, [#allocation9], 128, 128, 8
    $region33: #{tpu_custom_call.1} parent=1 // pred_fallthru
      _
    // Predicated region
    $region34: #{tpu_custom_call.1} parent=1 // pred_check
      _
    $region35: #{tpu_custom_call.1} parent=1 // pred_check_branch
      %88 = sbr.rel (0) target = $region37
    $region36: #{tpu_custom_call.1} parent=1 // pred_region
      _
    $region37: #{tpu_custom_call.1} parent=1 // pred_fallthru
      _
    // Predicated region
    $region38: #{tpu_custom_call.1} parent=1 // pred_check
      _
    $region39: #{tpu_custom_call.1} parent=1 // pred_check_branch
      %90 = sbr.rel (0) target = $region41
    $region40: #{tpu_custom_call.1} parent=1 // pred_region
      %s92 = ssub.s32 2048, 2048
      %93 = vsyncadd [#allocation12], %s92
      %s94 = sshll.u32 [#allocation11], 4
      %s95 = int_to_ptr.vmem [resolvable:$true] %s94
      %100 = dma.hbm_to_vmem [thread:$0]  %s9, 2048, %s95, [#allocation12], 128, 128, 8
    $region41: #{tpu_custom_call.1} parent=1 // pred_fallthru
      _
    // Predicated region
    $region42: #{tpu_custom_call.1} parent=1 // pred_check
      _
    $region43: #{tpu_custom_call.1} parent=1 // pred_check_branch
      %102 = sbr.rel (0) target = $region45
    $region44: #{tpu_custom_call.1} parent=1 // pred_region
      _
    $region45: #{tpu_custom_call.1} parent=1 // pred_fallthru
      _
    // Predicated region
    $region46: #{tpu_custom_call.1} parent=1 // pred_check
      _
    $region47: #{tpu_custom_call.1} parent=1 // pred_check_branch
      %104 = sbr.rel (0) target = $region49
    $region48: #{tpu_custom_call.1} parent=1 // pred_region
      %s106 = ssub.s32 2048, 2048
      %107 = vsyncadd [#allocation12], %s106
      %s108 = sshll.u32 [#allocation13], 4
      %s109 = int_to_ptr.vmem [resolvable:$true] %s108
      %114 = dma.hbm_to_vmem [thread:$0]  %s11, 2048, %s109, [#allocation12], 128, 128, 8
    $region49: #{tpu_custom_call.1} parent=1 // pred_fallthru
      _
    // Predicated region
    $region50: #{tpu_custom_call.1} parent=1 // pred_check
      _
    $region51: #{tpu_custom_call.1} parent=1 // pred_check_branch
      %116 = sbr.rel (0) target = $region53
    $region52: #{tpu_custom_call.1} parent=1 // pred_region
      _
    $region53: #{tpu_custom_call.1} parent=1 // pred_fallthru
      _
    // Predicated region
    $region54: #{tpu_custom_call.1} parent=1 // pred_check
      _
    $region55: #{tpu_custom_call.1} parent=1 // pred_check_branch
      %118 = sbr.rel (0) target = $region57
    $region56: #{tpu_custom_call.1} parent=1 // pred_region
      %119 = dma.done [#allocation3], 128
    $region57: #{tpu_custom_call.1} parent=1 // pred_fallthru
      _
    // Predicated region
    $region58: #{tpu_custom_call.1} parent=1 // pred_check
      _
    $region59: #{tpu_custom_call.1} parent=1 // pred_check_branch
      %121 = sbr.rel (0) target = $region61
    $region60: #{tpu_custom_call.1} parent=1 // pred_region
      %122 = dma.done [#allocation6], 8192
    $region61: #{tpu_custom_call.1} parent=1 // pred_fallthru
      _
    // Predicated region
    $region62: #{tpu_custom_call.1} parent=1 // pred_check
      _
    $region63: #{tpu_custom_call.1} parent=1 // pred_check_branch
      %124 = sbr.rel (0) target = $region65
    $region64: #{tpu_custom_call.1} parent=1 // pred_region
      %125 = dma.done [#allocation6], 16384
    $region65: #{tpu_custom_call.1} parent=1 // pred_fallthru
      _
    // Predicated region
    $region66: #{tpu_custom_call.1} parent=1 // pred_check
      _
    $region67: #{tpu_custom_call.1} parent=1 // pred_check_branch
      %127 = sbr.rel (0) target = $region69
    $region68: #{tpu_custom_call.1} parent=1 // pred_region
      %128 = dma.done [#allocation9], 4096
    $region69: #{tpu_custom_call.1} parent=1 // pred_fallthru
      _
    // Predicated region
    $region70: #{tpu_custom_call.1} parent=1 // pred_check
      _
    $region71: #{tpu_custom_call.1} parent=1 // pred_check_branch
      %130 = sbr.rel (0) target = $region73
    $region72: #{tpu_custom_call.1} parent=1 // pred_region
      %131 = dma.done [#allocation9], 2048
    $region73: #{tpu_custom_call.1} parent=1 // pred_fallthru
      _
    // Predicated region
    $region74: #{tpu_custom_call.1} parent=1 // pred_check
      _
    $region75: #{tpu_custom_call.1} parent=1 // pred_check_branch
      %133 = sbr.rel (0) target = $region77
    $region76: #{tpu_custom_call.1} parent=1 // pred_region
      %134 = dma.done [#allocation12], 2048
    $region77: #{tpu_custom_call.1} parent=1 // pred_fallthru
      _
    // Predicated region
    $region78: #{tpu_custom_call.1} parent=1 // pred_check
      _
    $region79: #{tpu_custom_call.1} parent=1 // pred_check_branch
      %136 = sbr.rel (0) target = $region81
    $region80: #{tpu_custom_call.1} parent=1 // pred_region
      %137 = dma.done [#allocation12], 2048
    $region81: #{tpu_custom_call.1} parent=1 // pred_fallthru
      _
    %v138 = vld [vmem:[#allocation2] sm:$0xff]
    %v139 = vld [vmem:[#allocation5] sm:$0xff]
    %v140 = vld [vmem:[#allocation5 + $0x8] sm:$0xff]
    %v141 = vld [vmem:[#allocation5 + $0x10] sm:$0xff]
    %v142 = vld [vmem:[#allocation5 + $0x18] sm:$0xff]
    %v143 = vld [vmem:[#allocation5 + $0x20] sm:$0xff]
    %v144 = vld [vmem:[#allocation5 + $0x28] sm:$0xff]
    %v145 = vld [vmem:[#allocation5 + $0x30] sm:$0xff]
    %v146 = vld [vmem:[#allocation5 + $0x38] sm:$0xff]
    %v147 = vld [vmem:[#allocation5 + $0x40] sm:$0xff]
    %v148 = vld [vmem:[#allocation5 + $0x48] sm:$0xff]
    %v149 = vld [vmem:[#allocation5 + $0x50] sm:$0xff]
    %v150 = vld [vmem:[#allocation5 + $0x58] sm:$0xff]
    %v151 = vld [vmem:[#allocation5 + $0x60] sm:$0xff]
    %v152 = vld [vmem:[#allocation5 + $0x68] sm:$0xff]
    %v153 = vld [vmem:[#allocation5 + $0x70] sm:$0xff]
    %v154 = vld [vmem:[#allocation5 + $0x78] sm:$0xff]
    %v155 = vld [vmem:[#allocation5 + $0x80] sm:$0xff]
    %v156 = vld [vmem:[#allocation5 + $0x88] sm:$0xff]
    %v157 = vld [vmem:[#allocation5 + $0x90] sm:$0xff]
    %v158 = vld [vmem:[#allocation5 + $0x98] sm:$0xff]
    %v159 = vld [vmem:[#allocation5 + $0xa0] sm:$0xff]
    %v160 = vld [vmem:[#allocation5 + $0xa8] sm:$0xff]
    %v161 = vld [vmem:[#allocation5 + $0xb0] sm:$0xff]
    %v162 = vld [vmem:[#allocation5 + $0xb8] sm:$0xff]
    %v163 = vld [vmem:[#allocation5 + $0xc0] sm:$0xff]
    %v164 = vld [vmem:[#allocation5 + $0xc8] sm:$0xff]
    %v165 = vld [vmem:[#allocation5 + $0xd0] sm:$0xff]
    %v166 = vld [vmem:[#allocation5 + $0xd8] sm:$0xff]
    %v167 = vld [vmem:[#allocation5 + $0xe0] sm:$0xff]
    %v168 = vld [vmem:[#allocation5 + $0xe8] sm:$0xff]
    %v169 = vld [vmem:[#allocation5 + $0xf0] sm:$0xff]
    %v170 = vld [vmem:[#allocation5 + $0xf8] sm:$0xff]
    %v171 = vld [vmem:[#allocation5 + $0x100] sm:$0xff]
    %v172 = vld [vmem:[#allocation5 + $0x108] sm:$0xff]
    %v173 = vld [vmem:[#allocation5 + $0x110] sm:$0xff]
    %v174 = vld [vmem:[#allocation5 + $0x118] sm:$0xff]
    %v175 = vld [vmem:[#allocation5 + $0x120] sm:$0xff]
    %v176 = vld [vmem:[#allocation5 + $0x128] sm:$0xff]
    %v177 = vld [vmem:[#allocation5 + $0x130] sm:$0xff]
    %v178 = vld [vmem:[#allocation5 + $0x138] sm:$0xff]
    %v179 = vld [vmem:[#allocation5 + $0x140] sm:$0xff]
    %v180 = vld [vmem:[#allocation5 + $0x148] sm:$0xff]
    %v181 = vld [vmem:[#allocation5 + $0x150] sm:$0xff]
    %v182 = vld [vmem:[#allocation5 + $0x158] sm:$0xff]
    %v183 = vld [vmem:[#allocation5 + $0x160] sm:$0xff]
    %v184 = vld [vmem:[#allocation5 + $0x168] sm:$0xff]
    %v185 = vld [vmem:[#allocation5 + $0x170] sm:$0xff]
    %v186 = vld [vmem:[#allocation5 + $0x178] sm:$0xff]
    %v187 = vld [vmem:[#allocation5 + $0x180] sm:$0xff]
    %v188 = vld [vmem:[#allocation5 + $0x188] sm:$0xff]
    %v189 = vld [vmem:[#allocation5 + $0x190] sm:$0xff]
    %v190 = vld [vmem:[#allocation5 + $0x198] sm:$0xff]
    %v191 = vld [vmem:[#allocation5 + $0x1a0] sm:$0xff]
    %v192 = vld [vmem:[#allocation5 + $0x1a8] sm:$0xff]
    %v193 = vld [vmem:[#allocation5 + $0x1b0] sm:$0xff]
    %v194 = vld [vmem:[#allocation5 + $0x1b8] sm:$0xff]
    %v195 = vld [vmem:[#allocation5 + $0x1c0] sm:$0xff]
    %v196 = vld [vmem:[#allocation5 + $0x1c8] sm:$0xff]
    %v197 = vld [vmem:[#allocation5 + $0x1d0] sm:$0xff]
    %v198 = vld [vmem:[#allocation5 + $0x1d8] sm:$0xff]
    %v199 = vld [vmem:[#allocation5 + $0x1e0] sm:$0xff]
    %v200 = vld [vmem:[#allocation5 + $0x1e8] sm:$0xff]
    %v201 = vld [vmem:[#allocation5 + $0x1f0] sm:$0xff]
    %v202 = vld [vmem:[#allocation5 + $0x1f8] sm:$0xff]
    %v203 = vld [vmem:[%s2] sm:$0xf]
    %v205 = vlaneseq
    %v206 = vshrl.u32 %v205, 7
    %v207 = vsub.s32 0, %v206
    %v208 = vrot.slane %v203, %v207
    %v209 = vlaneseq
    %v210 = vshrl.u32 %v209, 7
    %v211 = vsub.s32 1, %v210
    %v212 = vrot.slane %v203, %v211
    %v213 = vlaneseq
    %v214 = vshrl.u32 %v213, 7
    %v215 = vsub.s32 2, %v214
    %v216 = vrot.slane %v203, %v215
    %v217 = vlaneseq
    %v218 = vshrl.u32 %v217, 7
    %v219 = vsub.s32 3, %v218
    %v220 = vrot.slane %v203, %v219
    %225 = vmatprep.subr.mxu0 %v140
    %226 = vmatpush1.msra.mxu0 %v139
    %227 = vmatprep.subr.mxu0 %v144
    %228 = vmatpush1.msra.mxu0 %v143
    %229 = vmatprep.subr.mxu0 %v148
    %230 = vmatpush1.msra.mxu0 %v147
    %231 = vmatprep.subr.mxu0 %v152
    %232 = vmatpush1.msra.mxu0 %v151
    %233 = vmatprep.subr.mxu0 %v156
    %234 = vmatpush1.msra.mxu0 %v155
    %235 = vmatprep.subr.mxu0 %v160
    %236 = vmatpush1.msra.mxu0 %v159
    %237 = vmatprep.subr.mxu0 %v164
    %238 = vmatpush1.msra.mxu0 %v163
    %239 = vmatprep.subr.mxu0 %v168
    %240 = vmatpush1.msra.mxu0 %v167
    %241 = vmatprep.subr.mxu0 %v172
    %242 = vmatpush1.msra.mxu0 %v171
    %243 = vmatprep.subr.mxu0 %v176
    %244 = vmatpush1.msra.mxu0 %v175
    %245 = vmatprep.subr.mxu0 %v180
    %246 = vmatpush1.msra.mxu0 %v179
    %247 = vmatprep.subr.mxu0 %v184
    %248 = vmatpush1.msra.mxu0 %v183
    %249 = vmatprep.subr.mxu0 %v188
    %250 = vmatpush1.msra.mxu0 %v187
    %251 = vmatprep.subr.mxu0 %v192
    %252 = vmatpush1.msra.mxu0 %v191
    %253 = vmatprep.subr.mxu0 %v196
    %254 = vmatpush1.msra.mxu0 %v195
    %255 = vmatprep.subr.mxu0 %v200
    %256 = vmatpush1.msra.mxu0 %v199
    %257 = vmatprep.subr.mxu0 0.0
    %258 = vmatpush1.msra.mxu0 0.0
    %259 = vmatprep.subr.mxu0 0.0
    %260 = vmatpush1.msra.mxu0 0.0
    %261 = vmatprep.subr.mxu0 0.0
    %262 = vmatpush1.msra.mxu0 0.0
    %263 = vmatprep.subr.mxu0 0.0
    %264 = vmatpush1.msra.mxu0 0.0
    %265 = vmatprep.subr.mxu0 0.0
    %266 = vmatpush1.msra.mxu0 0.0
    %267 = vmatprep.subr.mxu0 0.0
    %268 = vmatpush1.msra.mxu0 0.0
    %269 = vmatprep.subr.mxu0 0.0
    %270 = vmatpush1.msra.mxu0 0.0
    %271 = vmatprep.subr.mxu0 0.0
    %272 = vmatpush1.msra.mxu0 0.0
    %273 = vmatprep.subr.mxu0 0.0
    %274 = vmatpush1.msra.mxu0 0.0
    %275 = vmatprep.subr.mxu0 0.0
    %276 = vmatpush1.msra.mxu0 0.0
    %277 = vmatprep.subr.mxu0 0.0
    %278 = vmatpush1.msra.mxu0 0.0
    %279 = vmatprep.subr.mxu0 0.0
    %280 = vmatpush1.msra.mxu0 0.0
    %281 = vmatprep.subr.mxu0 0.0
    %282 = vmatpush1.msra.mxu0 0.0
    %283 = vmatprep.subr.mxu0 0.0
    %284 = vmatpush1.msra.mxu0 0.0
    %285 = vmatprep.subr.mxu0 0.0
    %286 = vmatpush1.msra.mxu0 0.0
    %287 = vmatprep.subr.mxu0 0.0
    %288 = vmatpush1.msra.mxu0 0.0
    %289 = vmatprep.mubr.f32.mxu0 0.0
    %290 = vmatmul.mubr.f32.gmra.mrb[0].mxu0 %v138
    %v291 = vpop.f32.mrb[0].mxu0
    %v292 = vadd.f32 %v208, %v291
    %v293 = vpop.f32.mrb[0].mxu0
    %v294 = vadd.f32 %v212, %v293
    %295 = vdwg.mxu0
    %296 = vmatprep.subr.mxu0 %v142
    %297 = vmatpush1.msra.mxu0 %v141
    %298 = vmatprep.subr.mxu0 %v146
    %299 = vmatpush1.msra.mxu0 %v145
    %300 = vmatprep.subr.mxu0 %v150
    %301 = vmatpush1.msra.mxu0 %v149
    %302 = vmatprep.subr.mxu0 %v154
    %303 = vmatpush1.msra.mxu0 %v153
    %304 = vmatprep.subr.mxu0 %v158
    %305 = vmatpush1.msra.mxu0 %v157
    %306 = vmatprep.subr.mxu0 %v162
    %307 = vmatpush1.msra.mxu0 %v161
    %308 = vmatprep.subr.mxu0 %v166
    %309 = vmatpush1.msra.mxu0 %v165
    %310 = vmatprep.subr.mxu0 %v170
    %311 = vmatpush1.msra.mxu0 %v169
    %312 = vmatprep.subr.mxu0 %v174
    %313 = vmatpush1.msra.mxu0 %v173
    %314 = vmatprep.subr.mxu0 %v178
    %315 = vmatpush1.msra.mxu0 %v177
    %316 = vmatprep.subr.mxu0 %v182
    %317 = vmatpush1.msra.mxu0 %v181
    %318 = vmatprep.subr.mxu0 %v186
    %319 = vmatpush1.msra.mxu0 %v185
    %320 = vmatprep.subr.mxu0 %v190
    %321 = vmatpush1.msra.mxu0 %v189
    %322 = vmatprep.subr.mxu0 %v194
    %323 = vmatpush1.msra.mxu0 %v193
    %324 = vmatprep.subr.mxu0 %v198
    %325 = vmatpush1.msra.mxu0 %v197
    %326 = vmatprep.subr.mxu0 %v202
    %327 = vmatpush1.msra.mxu0 %v201
    %328 = vmatprep.subr.mxu0 0.0
    %329 = vmatpush1.msra.mxu0 0.0
    %330 = vmatprep.subr.mxu0 0.0
    %331 = vmatpush1.msra.mxu0 0.0
    %332 = vmatprep.subr.mxu0 0.0
    %333 = vmatpush1.msra.mxu0 0.0
    %334 = vmatprep.subr.mxu0 0.0
    %335 = vmatpush1.msra.mxu0 0.0
    %336 = vmatprep.subr.mxu0 0.0
    %337 = vmatpush1.msra.mxu0 0.0
    %338 = vmatprep.subr.mxu0 0.0
    %339 = vmatpush1.msra.mxu0 0.0
    %340 = vmatprep.subr.mxu0 0.0
    %341 = vmatpush1.msra.mxu0 0.0
    %342 = vmatprep.subr.mxu0 0.0
    %343 = vmatpush1.msra.mxu0 0.0
    %344 = vmatprep.subr.mxu0 0.0
    %345 = vmatpush1.msra.mxu0 0.0
    %346 = vmatprep.subr.mxu0 0.0
    %347 = vmatpush1.msra.mxu0 0.0
    %348 = vmatprep.subr.mxu0 0.0
    %349 = vmatpush1.msra.mxu0 0.0
    %350 = vmatprep.subr.mxu0 0.0
    %351 = vmatpush1.msra.mxu0 0.0
    %352 = vmatprep.subr.mxu0 0.0
    %353 = vmatpush1.msra.mxu0 0.0
    %354 = vmatprep.subr.mxu0 0.0
    %355 = vmatpush1.msra.mxu0 0.0
    %356 = vmatprep.subr.mxu0 0.0
    %357 = vmatpush1.msra.mxu0 0.0
    %358 = vmatprep.subr.mxu0 0.0
    %359 = vmatpush1.msra.mxu0 0.0
    %360 = vmatprep.mubr.f32.mxu0 0.0
    %361 = vmatmul.mubr.f32.gmra.mrb[0].mxu0 %v138
    %v362 = vpop.f32.mrb[0].mxu0
    %v363 = vadd.f32 %v216, %v362
    %v364 = vpop.f32.mrb[0].mxu0
    %v365 = vadd.f32 %v220, %v364
    %366 = vdwg.mxu0
    %v367 = vmax.f32 %v292, 0.0
    %v368 = vmax.f32 %v294, 0.0
    %v369 = vmax.f32 %v363, 0.0
    %v370 = vmax.f32 %v365, 0.0
    %v371 = vld [vmem:[#allocation7] sm:$0xff]
    %v372 = vld [vmem:[#allocation7 + $0x8] sm:$0xff]
    %v373 = vld [vmem:[#allocation7 + $0x10] sm:$0xff]
    %v374 = vld [vmem:[#allocation7 + $0x18] sm:$0xff]
    %v375 = vld [vmem:[#allocation7 + $0x20] sm:$0xff]
    %v376 = vld [vmem:[#allocation7 + $0x28] sm:$0xff]
    %v377 = vld [vmem:[#allocation7 + $0x30] sm:$0xff]
    %v378 = vld [vmem:[#allocation7 + $0x38] sm:$0xff]
    %v379 = vld [vmem:[#allocation7 + $0x40] sm:$0xff]
    %v380 = vld [vmem:[#allocation7 + $0x48] sm:$0xff]
    %v381 = vld [vmem:[#allocation7 + $0x50] sm:$0xff]
    %v382 = vld [vmem:[#allocation7 + $0x58] sm:$0xff]
    %v383 = vld [vmem:[#allocation7 + $0x60] sm:$0xff]
    %v384 = vld [vmem:[#allocation7 + $0x68] sm:$0xff]
    %v385 = vld [vmem:[#allocation7 + $0x70] sm:$0xff]
    %v386 = vld [vmem:[#allocation7 + $0x78] sm:$0xff]
    %v387 = vld [vmem:[#allocation7 + $0x80] sm:$0xff]
    %v388 = vld [vmem:[#allocation7 + $0x88] sm:$0xff]
    %v389 = vld [vmem:[#allocation7 + $0x90] sm:$0xff]
    %v390 = vld [vmem:[#allocation7 + $0x98] sm:$0xff]
    %v391 = vld [vmem:[#allocation7 + $0xa0] sm:$0xff]
    %v392 = vld [vmem:[#allocation7 + $0xa8] sm:$0xff]
    %v393 = vld [vmem:[#allocation7 + $0xb0] sm:$0xff]
    %v394 = vld [vmem:[#allocation7 + $0xb8] sm:$0xff]
    %v395 = vld [vmem:[#allocation7 + $0xc0] sm:$0xff]
    %v396 = vld [vmem:[#allocation7 + $0xc8] sm:$0xff]
    %v397 = vld [vmem:[#allocation7 + $0xd0] sm:$0xff]
    %v398 = vld [vmem:[#allocation7 + $0xd8] sm:$0xff]
    %v399 = vld [vmem:[#allocation7 + $0xe0] sm:$0xff]
    %v400 = vld [vmem:[#allocation7 + $0xe8] sm:$0xff]
    %v401 = vld [vmem:[#allocation7 + $0xf0] sm:$0xff]
    %v402 = vld [vmem:[#allocation7 + $0xf8] sm:$0xff]
    %v403 = vld [vmem:[#allocation7 + $0x100] sm:$0xff]
    %v404 = vld [vmem:[#allocation7 + $0x108] sm:$0xff]
    %v405 = vld [vmem:[#allocation7 + $0x110] sm:$0xff]
    %v406 = vld [vmem:[#allocation7 + $0x118] sm:$0xff]
    %v407 = vld [vmem:[#allocation7 + $0x120] sm:$0xff]
    %v408 = vld [vmem:[#allocation7 + $0x128] sm:$0xff]
    %v409 = vld [vmem:[#allocation7 + $0x130] sm:$0xff]
    %v410 = vld [vmem:[#allocation7 + $0x138] sm:$0xff]
    %v411 = vld [vmem:[#allocation7 + $0x140] sm:$0xff]
    %v412 = vld [vmem:[#allocation7 + $0x148] sm:$0xff]
    %v413 = vld [vmem:[#allocation7 + $0x150] sm:$0xff]
    %v414 = vld [vmem:[#allocation7 + $0x158] sm:$0xff]
    %v415 = vld [vmem:[#allocation7 + $0x160] sm:$0xff]
    %v416 = vld [vmem:[#allocation7 + $0x168] sm:$0xff]
    %v417 = vld [vmem:[#allocation7 + $0x170] sm:$0xff]
    %v418 = vld [vmem:[#allocation7 + $0x178] sm:$0xff]
    %v419 = vld [vmem:[#allocation7 + $0x180] sm:$0xff]
    %v420 = vld [vmem:[#allocation7 + $0x188] sm:$0xff]
    %v421 = vld [vmem:[#allocation7 + $0x190] sm:$0xff]
    %v422 = vld [vmem:[#allocation7 + $0x198] sm:$0xff]
    %v423 = vld [vmem:[#allocation7 + $0x1a0] sm:$0xff]
    %v424 = vld [vmem:[#allocation7 + $0x1a8] sm:$0xff]
    %v425 = vld [vmem:[#allocation7 + $0x1b0] sm:$0xff]
    %v426 = vld [vmem:[#allocation7 + $0x1b8] sm:$0xff]
    %v427 = vld [vmem:[#allocation7 + $0x1c0] sm:$0xff]
    %v428 = vld [vmem:[#allocation7 + $0x1c8] sm:$0xff]
    %v429 = vld [vmem:[#allocation7 + $0x1d0] sm:$0xff]
    %v430 = vld [vmem:[#allocation7 + $0x1d8] sm:$0xff]
    %v431 = vld [vmem:[#allocation7 + $0x1e0] sm:$0xff]
    %v432 = vld [vmem:[#allocation7 + $0x1e8] sm:$0xff]
    %v433 = vld [vmem:[#allocation7 + $0x1f0] sm:$0xff]
    %v434 = vld [vmem:[#allocation7 + $0x1f8] sm:$0xff]
    %v435 = vld [vmem:[#allocation7 + $0x200] sm:$0xff]
    %v436 = vld [vmem:[#allocation7 + $0x208] sm:$0xff]
    %v437 = vld [vmem:[#allocation7 + $0x210] sm:$0xff]
    %v438 = vld [vmem:[#allocation7 + $0x218] sm:$0xff]
    %v439 = vld [vmem:[#allocation7 + $0x220] sm:$0xff]
    %v440 = vld [vmem:[#allocation7 + $0x228] sm:$0xff]
    %v441 = vld [vmem:[#allocation7 + $0x230] sm:$0xff]
    %v442 = vld [vmem:[#allocation7 + $0x238] sm:$0xff]
    %v443 = vld [vmem:[#allocation7 + $0x240] sm:$0xff]
    %v444 = vld [vmem:[#allocation7 + $0x248] sm:$0xff]
    %v445 = vld [vmem:[#allocation7 + $0x250] sm:$0xff]
    %v446 = vld [vmem:[#allocation7 + $0x258] sm:$0xff]
    %v447 = vld [vmem:[#allocation7 + $0x260] sm:$0xff]
    %v448 = vld [vmem:[#allocation7 + $0x268] sm:$0xff]
    %v449 = vld [vmem:[#allocation7 + $0x270] sm:$0xff]
    %v450 = vld [vmem:[#allocation7 + $0x278] sm:$0xff]
    %v451 = vld [vmem:[#allocation7 + $0x280] sm:$0xff]
    %v452 = vld [vmem:[#allocation7 + $0x288] sm:$0xff]
    %v453 = vld [vmem:[#allocation7 + $0x290] sm:$0xff]
    %v454 = vld [vmem:[#allocation7 + $0x298] sm:$0xff]
    %v455 = vld [vmem:[#allocation7 + $0x2a0] sm:$0xff]
    %v456 = vld [vmem:[#allocation7 + $0x2a8] sm:$0xff]
    %v457 = vld [vmem:[#allocation7 + $0x2b0] sm:$0xff]
    %v458 = vld [vmem:[#allocation7 + $0x2b8] sm:$0xff]
    %v459 = vld [vmem:[#allocation7 + $0x2c0] sm:$0xff]
    %v460 = vld [vmem:[#allocation7 + $0x2c8] sm:$0xff]
    %v461 = vld [vmem:[#allocation7 + $0x2d0] sm:$0xff]
    %v462 = vld [vmem:[#allocation7 + $0x2d8] sm:$0xff]
    %v463 = vld [vmem:[#allocation7 + $0x2e0] sm:$0xff]
    %v464 = vld [vmem:[#allocation7 + $0x2e8] sm:$0xff]
    %v465 = vld [vmem:[#allocation7 + $0x2f0] sm:$0xff]
    %v466 = vld [vmem:[#allocation7 + $0x2f8] sm:$0xff]
    %v467 = vld [vmem:[#allocation7 + $0x300] sm:$0xff]
    %v468 = vld [vmem:[#allocation7 + $0x308] sm:$0xff]
    %v469 = vld [vmem:[#allocation7 + $0x310] sm:$0xff]
    %v470 = vld [vmem:[#allocation7 + $0x318] sm:$0xff]
    %v471 = vld [vmem:[#allocation7 + $0x320] sm:$0xff]
    %v472 = vld [vmem:[#allocation7 + $0x328] sm:$0xff]
    %v473 = vld [vmem:[#allocation7 + $0x330] sm:$0xff]
    %v474 = vld [vmem:[#allocation7 + $0x338] sm:$0xff]
    %v475 = vld [vmem:[#allocation7 + $0x340] sm:$0xff]
    %v476 = vld [vmem:[#allocation7 + $0x348] sm:$0xff]
    %v477 = vld [vmem:[#allocation7 + $0x350] sm:$0xff]
    %v478 = vld [vmem:[#allocation7 + $0x358] sm:$0xff]
    %v479 = vld [vmem:[#allocation7 + $0x360] sm:$0xff]
    %v480 = vld [vmem:[#allocation7 + $0x368] sm:$0xff]
    %v481 = vld [vmem:[#allocation7 + $0x370] sm:$0xff]
    %v482 = vld [vmem:[#allocation7 + $0x378] sm:$0xff]
    %v483 = vld [vmem:[#allocation7 + $0x380] sm:$0xff]
    %v484 = vld [vmem:[#allocation7 + $0x388] sm:$0xff]
    %v485 = vld [vmem:[#allocation7 + $0x390] sm:$0xff]
    %v486 = vld [vmem:[#allocation7 + $0x398] sm:$0xff]
    %v487 = vld [vmem:[#allocation7 + $0x3a0] sm:$0xff]
    %v488 = vld [vmem:[#allocation7 + $0x3a8] sm:$0xff]
    %v489 = vld [vmem:[#allocation7 + $0x3b0] sm:$0xff]
    %v490 = vld [vmem:[#allocation7 + $0x3b8] sm:$0xff]
    %v491 = vld [vmem:[#allocation7 + $0x3c0] sm:$0xff]
    %v492 = vld [vmem:[#allocation7 + $0x3c8] sm:$0xff]
    %v493 = vld [vmem:[#allocation7 + $0x3d0] sm:$0xff]
    %v494 = vld [vmem:[#allocation7 + $0x3d8] sm:$0xff]
    %v495 = vld [vmem:[#allocation7 + $0x3e0] sm:$0xff]
    %v496 = vld [vmem:[#allocation7 + $0x3e8] sm:$0xff]
    %v497 = vld [vmem:[#allocation7 + $0x3f0] sm:$0xff]
    %v498 = vld [vmem:[#allocation7 + $0x3f8] sm:$0xff]
    %v499 = vld [vmem:[%s4] sm:$0x3]
    %v501 = vlaneseq
    %v502 = vshrl.u32 %v501, 7
    %v503 = vsub.s32 0, %v502
    %v504 = vrot.slane %v499, %v503
    %v505 = vlaneseq
    %v506 = vshrl.u32 %v505, 7
    %v507 = vsub.s32 1, %v506
    %v508 = vrot.slane %v499, %v507
    %511 = vmatprep.subr.mxu0 %v372
    %512 = vmatpush1.msra.mxu0 %v371
    %513 = vmatprep.subr.mxu0 %v374
    %514 = vmatpush1.msra.mxu0 %v373
    %515 = vmatprep.subr.mxu0 %v376
    %516 = vmatpush1.msra.mxu0 %v375
    %517 = vmatprep.subr.mxu0 %v378
    %518 = vmatpush1.msra.mxu0 %v377
    %519 = vmatprep.subr.mxu0 %v380
    %520 = vmatpush1.msra.mxu0 %v379
    %521 = vmatprep.subr.mxu0 %v382
    %522 = vmatpush1.msra.mxu0 %v381
    %523 = vmatprep.subr.mxu0 %v384
    %524 = vmatpush1.msra.mxu0 %v383
    %525 = vmatprep.subr.mxu0 %v386
    %526 = vmatpush1.msra.mxu0 %v385
    %527 = vmatprep.subr.mxu0 %v388
    %528 = vmatpush1.msra.mxu0 %v387
    %529 = vmatprep.subr.mxu0 %v390
    %530 = vmatpush1.msra.mxu0 %v389
    %531 = vmatprep.subr.mxu0 %v392
    %532 = vmatpush1.msra.mxu0 %v391
    %533 = vmatprep.subr.mxu0 %v394
    %534 = vmatpush1.msra.mxu0 %v393
    %535 = vmatprep.subr.mxu0 %v396
    %536 = vmatpush1.msra.mxu0 %v395
    %537 = vmatprep.subr.mxu0 %v398
    %538 = vmatpush1.msra.mxu0 %v397
    %539 = vmatprep.subr.mxu0 %v400
    %540 = vmatpush1.msra.mxu0 %v399
    %541 = vmatprep.subr.mxu0 %v402
    %542 = vmatpush1.msra.mxu0 %v401
    %543 = vmatprep.subr.mxu0 %v404
    %544 = vmatpush1.msra.mxu0 %v403
    %545 = vmatprep.subr.mxu0 %v406
    %546 = vmatpush1.msra.mxu0 %v405
    %547 = vmatprep.subr.mxu0 %v408
    %548 = vmatpush1.msra.mxu0 %v407
    %549 = vmatprep.subr.mxu0 %v410
    %550 = vmatpush1.msra.mxu0 %v409
    %551 = vmatprep.subr.mxu0 %v412
    %552 = vmatpush1.msra.mxu0 %v411
    %553 = vmatprep.subr.mxu0 %v414
    %554 = vmatpush1.msra.mxu0 %v413
    %555 = vmatprep.subr.mxu0 %v416
    %556 = vmatpush1.msra.mxu0 %v415
    %557 = vmatprep.subr.mxu0 %v418
    %558 = vmatpush1.msra.mxu0 %v417
    %559 = vmatprep.subr.mxu0 %v420
    %560 = vmatpush1.msra.mxu0 %v419
    %561 = vmatprep.subr.mxu0 %v422
    %562 = vmatpush1.msra.mxu0 %v421
    %563 = vmatprep.subr.mxu0 %v424
    %564 = vmatpush1.msra.mxu0 %v423
    %565 = vmatprep.subr.mxu0 %v426
    %566 = vmatpush1.msra.mxu0 %v425
    %567 = vmatprep.subr.mxu0 %v428
    %568 = vmatpush1.msra.mxu0 %v427
    %569 = vmatprep.subr.mxu0 %v430
    %570 = vmatpush1.msra.mxu0 %v429
    %571 = vmatprep.subr.mxu0 %v432
    %572 = vmatpush1.msra.mxu0 %v431
    %573 = vmatprep.subr.mxu0 %v434
    %574 = vmatpush1.msra.mxu0 %v433
    %575 = vmatprep.mubr.f32.mxu0 %v368
    %576 = vmatmul.mubr.f32.gmra.mrb[0].mxu0 %v367
    %v577 = vpop.f32.mrb[0].mxu0
    %v578 = vadd.f32 %v504, %v577
    %v579 = vpop.f32.mrb[0].mxu0
    %v580 = vadd.f32 %v508, %v579
    %581 = vdwg.mxu0
    %582 = vmatprep.subr.mxu0 %v436
    %583 = vmatpush1.msra.mxu0 %v435
    %584 = vmatprep.subr.mxu0 %v438
    %585 = vmatpush1.msra.mxu0 %v437
    %586 = vmatprep.subr.mxu0 %v440
    %587 = vmatpush1.msra.mxu0 %v439
    %588 = vmatprep.subr.mxu0 %v442
    %589 = vmatpush1.msra.mxu0 %v441
    %590 = vmatprep.subr.mxu0 %v444
    %591 = vmatpush1.msra.mxu0 %v443
    %592 = vmatprep.subr.mxu0 %v446
    %593 = vmatpush1.msra.mxu0 %v445
    %594 = vmatprep.subr.mxu0 %v448
    %595 = vmatpush1.msra.mxu0 %v447
    %596 = vmatprep.subr.mxu0 %v450
    %597 = vmatpush1.msra.mxu0 %v449
    %598 = vmatprep.subr.mxu0 %v452
    %599 = vmatpush1.msra.mxu0 %v451
    %600 = vmatprep.subr.mxu0 %v454
    %601 = vmatpush1.msra.mxu0 %v453
    %602 = vmatprep.subr.mxu0 %v456
    %603 = vmatpush1.msra.mxu0 %v455
    %604 = vmatprep.subr.mxu0 %v458
    %605 = vmatpush1.msra.mxu0 %v457
    %606 = vmatprep.subr.mxu0 %v460
    %607 = vmatpush1.msra.mxu0 %v459
    %608 = vmatprep.subr.mxu0 %v462
    %609 = vmatpush1.msra.mxu0 %v461
    %610 = vmatprep.subr.mxu0 %v464
    %611 = vmatpush1.msra.mxu0 %v463
    %612 = vmatprep.subr.mxu0 %v466
    %613 = vmatpush1.msra.mxu0 %v465
    %614 = vmatprep.subr.mxu0 %v468
    %615 = vmatpush1.msra.mxu0 %v467
    %616 = vmatprep.subr.mxu0 %v470
    %617 = vmatpush1.msra.mxu0 %v469
    %618 = vmatprep.subr.mxu0 %v472
    %619 = vmatpush1.msra.mxu0 %v471
    %620 = vmatprep.subr.mxu0 %v474
    %621 = vmatpush1.msra.mxu0 %v473
    %622 = vmatprep.subr.mxu0 %v476
    %623 = vmatpush1.msra.mxu0 %v475
    %624 = vmatprep.subr.mxu0 %v478
    %625 = vmatpush1.msra.mxu0 %v477
    %626 = vmatprep.subr.mxu0 %v480
    %627 = vmatpush1.msra.mxu0 %v479
    %628 = vmatprep.subr.mxu0 %v482
    %629 = vmatpush1.msra.mxu0 %v481
    %630 = vmatprep.subr.mxu0 %v484
    %631 = vmatpush1.msra.mxu0 %v483
    %632 = vmatprep.subr.mxu0 %v486
    %633 = vmatpush1.msra.mxu0 %v485
    %634 = vmatprep.subr.mxu0 %v488
    %635 = vmatpush1.msra.mxu0 %v487
    %636 = vmatprep.subr.mxu0 %v490
    %637 = vmatpush1.msra.mxu0 %v489
    %638 = vmatprep.subr.mxu0 %v492
    %639 = vmatpush1.msra.mxu0 %v491
    %640 = vmatprep.subr.mxu0 %v494
    %641 = vmatpush1.msra.mxu0 %v493
    %642 = vmatprep.subr.mxu0 %v496
    %643 = vmatpush1.msra.mxu0 %v495
    %644 = vmatprep.subr.mxu0 %v498
    %645 = vmatpush1.msra.mxu0 %v497
    %646 = vmatprep.mubr.f32.mxu0 %v370
    %647 = vmatmul.mubr.f32.gmra.mrb[0].mxu0 %v369
    %v648 = vpop.f32.mrb[0].mxu0
    %v649 = vadd.f32 %v578, %v648
    %v650 = vpop.f32.mrb[0].mxu0
    %v651 = vadd.f32 %v580, %v650
    %652 = vdwg.mxu0
    %v653 = vmax.f32 %v649, 0.0
    %v654 = vmax.f32 %v651, 0.0
    %v655 = vld [vmem:[#allocation8] sm:$0xff]
    %v656 = vld [vmem:[#allocation8 + $0x8] sm:$0xff]
    %v657 = vld [vmem:[#allocation8 + $0x10] sm:$0xff]
    %v658 = vld [vmem:[#allocation8 + $0x18] sm:$0xff]
    %v659 = vld [vmem:[#allocation8 + $0x20] sm:$0xff]
    %v660 = vld [vmem:[#allocation8 + $0x28] sm:$0xff]
    %v661 = vld [vmem:[#allocation8 + $0x30] sm:$0xff]
    %v662 = vld [vmem:[#allocation8 + $0x38] sm:$0xff]
    %v663 = vld [vmem:[#allocation8 + $0x40] sm:$0xff]
    %v664 = vld [vmem:[#allocation8 + $0x48] sm:$0xff]
    %v665 = vld [vmem:[#allocation8 + $0x50] sm:$0xff]
    %v666 = vld [vmem:[#allocation8 + $0x58] sm:$0xff]
    %v667 = vld [vmem:[#allocation8 + $0x60] sm:$0xff]
    %v668 = vld [vmem:[#allocation8 + $0x68] sm:$0xff]
    %v669 = vld [vmem:[#allocation8 + $0x70] sm:$0xff]
    %v670 = vld [vmem:[#allocation8 + $0x78] sm:$0xff]
    %v671 = vld [vmem:[#allocation8 + $0x80] sm:$0xff]
    %v672 = vld [vmem:[#allocation8 + $0x88] sm:$0xff]
    %v673 = vld [vmem:[#allocation8 + $0x90] sm:$0xff]
    %v674 = vld [vmem:[#allocation8 + $0x98] sm:$0xff]
    %v675 = vld [vmem:[#allocation8 + $0xa0] sm:$0xff]
    %v676 = vld [vmem:[#allocation8 + $0xa8] sm:$0xff]
    %v677 = vld [vmem:[#allocation8 + $0xb0] sm:$0xff]
    %v678 = vld [vmem:[#allocation8 + $0xb8] sm:$0xff]
    %v679 = vld [vmem:[#allocation8 + $0xc0] sm:$0xff]
    %v680 = vld [vmem:[#allocation8 + $0xc8] sm:$0xff]
    %v681 = vld [vmem:[#allocation8 + $0xd0] sm:$0xff]
    %v682 = vld [vmem:[#allocation8 + $0xd8] sm:$0xff]
    %v683 = vld [vmem:[#allocation8 + $0xe0] sm:$0xff]
    %v684 = vld [vmem:[#allocation8 + $0xe8] sm:$0xff]
    %v685 = vld [vmem:[#allocation8 + $0xf0] sm:$0xff]
    %v686 = vld [vmem:[#allocation8 + $0xf8] sm:$0xff]
    %v687 = vld [vmem:[%s6] sm:$0x1]
    %v689 = vlaneseq
    %v690 = vshrl.u32 %v689, 7
    %v691 = vsub.s32 0, %v690
    %v692 = vrot.slane %v687, %v691
    %694 = vmatprep.subr.mxu0 0.0
    %695 = vmatpush1.msra.mxu0 %v655
    %696 = vmatprep.subr.mxu0 0.0
    %697 = vmatpush1.msra.mxu0 %v656
    %698 = vmatprep.subr.mxu0 0.0
    %699 = vmatpush1.msra.mxu0 %v657
    %700 = vmatprep.subr.mxu0 0.0
    %701 = vmatpush1.msra.mxu0 %v658
    %702 = vmatprep.subr.mxu0 0.0
    %703 = vmatpush1.msra.mxu0 %v659
    %704 = vmatprep.subr.mxu0 0.0
    %705 = vmatpush1.msra.mxu0 %v660
    %706 = vmatprep.subr.mxu0 0.0
    %707 = vmatpush1.msra.mxu0 %v661
    %708 = vmatprep.subr.mxu0 0.0
    %709 = vmatpush1.msra.mxu0 %v662
    %710 = vmatprep.subr.mxu0 0.0
    %711 = vmatpush1.msra.mxu0 %v663
    %712 = vmatprep.subr.mxu0 0.0
    %713 = vmatpush1.msra.mxu0 %v664
    %714 = vmatprep.subr.mxu0 0.0
    %715 = vmatpush1.msra.mxu0 %v665
    %716 = vmatprep.subr.mxu0 0.0
    %717 = vmatpush1.msra.mxu0 %v666
    %718 = vmatprep.subr.mxu0 0.0
    %719 = vmatpush1.msra.mxu0 %v667
    %720 = vmatprep.subr.mxu0 0.0
    %721 = vmatpush1.msra.mxu0 %v668
    %722 = vmatprep.subr.mxu0 0.0
    %723 = vmatpush1.msra.mxu0 %v669
    %724 = vmatprep.subr.mxu0 0.0
    %725 = vmatpush1.msra.mxu0 %v670
    %726 = vmatprep.subr.mxu0 0.0
    %727 = vmatpush1.msra.mxu0 %v671
    %728 = vmatprep.subr.mxu0 0.0
    %729 = vmatpush1.msra.mxu0 %v672
    %730 = vmatprep.subr.mxu0 0.0
    %731 = vmatpush1.msra.mxu0 %v673
    %732 = vmatprep.subr.mxu0 0.0
    %733 = vmatpush1.msra.mxu0 %v674
    %734 = vmatprep.subr.mxu0 0.0
    %735 = vmatpush1.msra.mxu0 %v675
    %736 = vmatprep.subr.mxu0 0.0
    %737 = vmatpush1.msra.mxu0 %v676
    %738 = vmatprep.subr.mxu0 0.0
    %739 = vmatpush1.msra.mxu0 %v677
    %740 = vmatprep.subr.mxu0 0.0
    %741 = vmatpush1.msra.mxu0 %v678
    %742 = vmatprep.subr.mxu0 0.0
    %743 = vmatpush1.msra.mxu0 %v679
    %744 = vmatprep.subr.mxu0 0.0
    %745 = vmatpush1.msra.mxu0 %v680
    %746 = vmatprep.subr.mxu0 0.0
    %747 = vmatpush1.msra.mxu0 %v681
    %748 = vmatprep.subr.mxu0 0.0
    %749 = vmatpush1.msra.mxu0 %v682
    %750 = vmatprep.subr.mxu0 0.0
    %751 = vmatpush1.msra.mxu0 %v683
    %752 = vmatprep.subr.mxu0 0.0
    %753 = vmatpush1.msra.mxu0 %v684
    %754 = vmatprep.subr.mxu0 0.0
    %755 = vmatpush1.msra.mxu0 %v685
    %756 = vmatprep.subr.mxu0 0.0
    %757 = vmatpush1.msra.mxu0 %v686
    %758 = vmatprep.mubr.f32.mxu0 %v654
    %759 = vmatmul.mubr.f32.gmra.mrb[0].mxu0 %v653
    %v760 = vpop.f32.mrb[0].mxu0
    %v761 = vadd.f32 %v692, %v760
    %v762 = vpop.f32.mrb[0].mxu0
    %763 = vdwg.mxu0
    %v764 = vmax.f32 %v761, 0.0
    %v765 = vld [vmem:[#allocation10] sm:$0xff]
    %v766 = vld [vmem:[#allocation10 + $0x8] sm:$0xff]
    %v767 = vld [vmem:[#allocation10 + $0x10] sm:$0xff]
    %v768 = vld [vmem:[#allocation10 + $0x18] sm:$0xff]
    %v769 = vld [vmem:[#allocation10 + $0x20] sm:$0xff]
    %v770 = vld [vmem:[#allocation10 + $0x28] sm:$0xff]
    %v771 = vld [vmem:[#allocation10 + $0x30] sm:$0xff]
    %v772 = vld [vmem:[#allocation10 + $0x38] sm:$0xff]
    %v773 = vld [vmem:[#allocation10 + $0x40] sm:$0xff]
    %v774 = vld [vmem:[#allocation10 + $0x48] sm:$0xff]
    %v775 = vld [vmem:[#allocation10 + $0x50] sm:$0xff]
    %v776 = vld [vmem:[#allocation10 + $0x58] sm:$0xff]
    %v777 = vld [vmem:[#allocation10 + $0x60] sm:$0xff]
    %v778 = vld [vmem:[#allocation10 + $0x68] sm:$0xff]
    %v779 = vld [vmem:[#allocation10 + $0x70] sm:$0xff]
    %v780 = vld [vmem:[#allocation10 + $0x78] sm:$0xff]
    %v781 = vld [vmem:[%s8] sm:$0x1]
    %v783 = vlaneseq
    %v784 = vshrl.u32 %v783, 7
    %v785 = vsub.s32 0, %v784
    %v786 = vrot.slane %v781, %v785
    %788 = vmatprep.subr.mxu0 0.0
    %789 = vmatpush1.msra.mxu0 %v765
    %790 = vmatprep.subr.mxu0 0.0
    %791 = vmatpush1.msra.mxu0 %v766
    %792 = vmatprep.subr.mxu0 0.0
    %793 = vmatpush1.msra.mxu0 %v767
    %794 = vmatprep.subr.mxu0 0.0
    %795 = vmatpush1.msra.mxu0 %v768
    %796 = vmatprep.subr.mxu0 0.0
    %797 = vmatpush1.msra.mxu0 %v769
    %798 = vmatprep.subr.mxu0 0.0
    %799 = vmatpush1.msra.mxu0 %v770
    %800 = vmatprep.subr.mxu0 0.0
    %801 = vmatpush1.msra.mxu0 %v771
    %802 = vmatprep.subr.mxu0 0.0
    %803 = vmatpush1.msra.mxu0 %v772
    %804 = vmatprep.subr.mxu0 0.0
    %805 = vmatpush1.msra.mxu0 %v773
    %806 = vmatprep.subr.mxu0 0.0
    %807 = vmatpush1.msra.mxu0 %v774
    %808 = vmatprep.subr.mxu0 0.0
    %809 = vmatpush1.msra.mxu0 %v775
    %810 = vmatprep.subr.mxu0 0.0
    %811 = vmatpush1.msra.mxu0 %v776
    %812 = vmatprep.subr.mxu0 0.0
    %813 = vmatpush1.msra.mxu0 %v777
    %814 = vmatprep.subr.mxu0 0.0
    %815 = vmatpush1.msra.mxu0 %v778
    %816 = vmatprep.subr.mxu0 0.0
    %817 = vmatpush1.msra.mxu0 %v779
    %818 = vmatprep.subr.mxu0 0.0
    %819 = vmatpush1.msra.mxu0 %v780
    %820 = vmatprep.subr.mxu0 0.0
    %821 = vmatpush1.msra.mxu0 0.0
    %822 = vmatprep.subr.mxu0 0.0
    %823 = vmatpush1.msra.mxu0 0.0
    %824 = vmatprep.subr.mxu0 0.0
    %825 = vmatpush1.msra.mxu0 0.0
    %826 = vmatprep.subr.mxu0 0.0
    %827 = vmatpush1.msra.mxu0 0.0
    %828 = vmatprep.subr.mxu0 0.0
    %829 = vmatpush1.msra.mxu0 0.0
    %830 = vmatprep.subr.mxu0 0.0
    %831 = vmatpush1.msra.mxu0 0.0
    %832 = vmatprep.subr.mxu0 0.0
    %833 = vmatpush1.msra.mxu0 0.0
    %834 = vmatprep.subr.mxu0 0.0
    %835 = vmatpush1.msra.mxu0 0.0
    %836 = vmatprep.subr.mxu0 0.0
    %837 = vmatpush1.msra.mxu0 0.0
    %838 = vmatprep.subr.mxu0 0.0
    %839 = vmatpush1.msra.mxu0 0.0
    %840 = vmatprep.subr.mxu0 0.0
    %841 = vmatpush1.msra.mxu0 0.0
    %842 = vmatprep.subr.mxu0 0.0
    %843 = vmatpush1.msra.mxu0 0.0
    %844 = vmatprep.subr.mxu0 0.0
    %845 = vmatpush1.msra.mxu0 0.0
    %846 = vmatprep.subr.mxu0 0.0
    %847 = vmatpush1.msra.mxu0 0.0
    %848 = vmatprep.subr.mxu0 0.0
    %849 = vmatpush1.msra.mxu0 0.0
    %850 = vmatprep.subr.mxu0 0.0
    %851 = vmatpush1.msra.mxu0 0.0
    %852 = vmatprep.mubr.f32.mxu0 0.0
    %853 = vmatmul.mubr.f32.gmra.mrb[0].mxu0 %v764
    %v854 = vpop.f32.mrb[0].mxu0
    %v855 = vadd.f32 %v786, %v854
    %v856 = vpop.f32.mrb[0].mxu0
    %857 = vdwg.mxu0
    %v858 = vmax.f32 %v855, 0.0
    %v859 = vld [vmem:[#allocation11] sm:$0xff]
    %v860 = vld [vmem:[#allocation11 + $0x8] sm:$0xff]
    %v861 = vld [vmem:[#allocation11 + $0x10] sm:$0xff]
    %v862 = vld [vmem:[#allocation11 + $0x18] sm:$0xff]
    %v863 = vld [vmem:[#allocation11 + $0x20] sm:$0xff]
    %v864 = vld [vmem:[#allocation11 + $0x28] sm:$0xff]
    %v865 = vld [vmem:[#allocation11 + $0x30] sm:$0xff]
    %v866 = vld [vmem:[#allocation11 + $0x38] sm:$0xff]
    %v867 = vld [vmem:[#allocation11 + $0x40] sm:$0xff]
    %v868 = vld [vmem:[#allocation11 + $0x48] sm:$0xff]
    %v869 = vld [vmem:[#allocation11 + $0x50] sm:$0xff]
    %v870 = vld [vmem:[#allocation11 + $0x58] sm:$0xff]
    %v871 = vld [vmem:[#allocation11 + $0x60] sm:$0xff]
    %v872 = vld [vmem:[#allocation11 + $0x68] sm:$0xff]
    %v873 = vld [vmem:[#allocation11 + $0x70] sm:$0xff]
    %v874 = vld [vmem:[#allocation11 + $0x78] sm:$0xff]
    %v875 = vld [vmem:[%s10] sm:$0x1]
    %v877 = vlaneseq
    %v878 = vshrl.u32 %v877, 7
    %v879 = vsub.s32 0, %v878
    %v880 = vrot.slane %v875, %v879
    %882 = vmatprep.subr.mxu0 0.0
    %883 = vmatpush1.msra.mxu0 %v859
    %884 = vmatprep.subr.mxu0 0.0
    %885 = vmatpush1.msra.mxu0 %v860
    %886 = vmatprep.subr.mxu0 0.0
    %887 = vmatpush1.msra.mxu0 %v861
    %888 = vmatprep.subr.mxu0 0.0
    %889 = vmatpush1.msra.mxu0 %v862
    %890 = vmatprep.subr.mxu0 0.0
    %891 = vmatpush1.msra.mxu0 %v863
    %892 = vmatprep.subr.mxu0 0.0
    %893 = vmatpush1.msra.mxu0 %v864
    %894 = vmatprep.subr.mxu0 0.0
    %895 = vmatpush1.msra.mxu0 %v865
    %896 = vmatprep.subr.mxu0 0.0
    %897 = vmatpush1.msra.mxu0 %v866
    %898 = vmatprep.subr.mxu0 0.0
    %899 = vmatpush1.msra.mxu0 %v867
    %900 = vmatprep.subr.mxu0 0.0
    %901 = vmatpush1.msra.mxu0 %v868
    %902 = vmatprep.subr.mxu0 0.0
    %903 = vmatpush1.msra.mxu0 %v869
    %904 = vmatprep.subr.mxu0 0.0
    %905 = vmatpush1.msra.mxu0 %v870
    %906 = vmatprep.subr.mxu0 0.0
    %907 = vmatpush1.msra.mxu0 %v871
    %908 = vmatprep.subr.mxu0 0.0
    %909 = vmatpush1.msra.mxu0 %v872
    %910 = vmatprep.subr.mxu0 0.0
    %911 = vmatpush1.msra.mxu0 %v873
    %912 = vmatprep.subr.mxu0 0.0
    %913 = vmatpush1.msra.mxu0 %v874
    %914 = vmatprep.subr.mxu0 0.0
    %915 = vmatpush1.msra.mxu0 0.0
    %916 = vmatprep.subr.mxu0 0.0
    %917 = vmatpush1.msra.mxu0 0.0
    %918 = vmatprep.subr.mxu0 0.0
    %919 = vmatpush1.msra.mxu0 0.0
    %920 = vmatprep.subr.mxu0 0.0
    %921 = vmatpush1.msra.mxu0 0.0
    %922 = vmatprep.subr.mxu0 0.0
    %923 = vmatpush1.msra.mxu0 0.0
    %924 = vmatprep.subr.mxu0 0.0
    %925 = vmatpush1.msra.mxu0 0.0
    %926 = vmatprep.subr.mxu0 0.0
    %927 = vmatpush1.msra.mxu0 0.0
    %928 = vmatprep.subr.mxu0 0.0
    %929 = vmatpush1.msra.mxu0 0.0
    %930 = vmatprep.subr.mxu0 0.0
    %931 = vmatpush1.msra.mxu0 0.0
    %932 = vmatprep.subr.mxu0 0.0
    %933 = vmatpush1.msra.mxu0 0.0
    %934 = vmatprep.subr.mxu0 0.0
    %935 = vmatpush1.msra.mxu0 0.0
    %936 = vmatprep.subr.mxu0 0.0
    %937 = vmatpush1.msra.mxu0 0.0
    %938 = vmatprep.subr.mxu0 0.0
    %939 = vmatpush1.msra.mxu0 0.0
    %940 = vmatprep.subr.mxu0 0.0
    %941 = vmatpush1.msra.mxu0 0.0
    %942 = vmatprep.subr.mxu0 0.0
    %943 = vmatpush1.msra.mxu0 0.0
    %944 = vmatprep.subr.mxu0 0.0
    %945 = vmatpush1.msra.mxu0 0.0
    %946 = vmatprep.mubr.f32.mxu0 0.0
    %947 = vmatmul.mubr.f32.gmra.mrb[0].mxu0 %v858
    %v948 = vpop.f32.mrb[0].mxu0
    %v949 = vadd.f32 %v880, %v948
    %v950 = vpop.f32.mrb[0].mxu0
    %951 = vdwg.mxu0
    %v952 = vmax.f32 %v949, 0.0
    %v953 = vld [vmem:[#allocation13] sm:$0xff]
    %v954 = vld [vmem:[#allocation13 + $0x8] sm:$0xff]
    %v955 = vld [vmem:[#allocation13 + $0x10] sm:$0xff]
    %v956 = vld [vmem:[#allocation13 + $0x18] sm:$0xff]
    %v957 = vld [vmem:[#allocation13 + $0x20] sm:$0xff]
    %v958 = vld [vmem:[#allocation13 + $0x28] sm:$0xff]
    %v959 = vld [vmem:[#allocation13 + $0x30] sm:$0xff]
    %v960 = vld [vmem:[#allocation13 + $0x38] sm:$0xff]
    %v961 = vld [vmem:[#allocation13 + $0x40] sm:$0xff]
    %v962 = vld [vmem:[#allocation13 + $0x48] sm:$0xff]
    %v963 = vld [vmem:[#allocation13 + $0x50] sm:$0xff]
    %v964 = vld [vmem:[#allocation13 + $0x58] sm:$0xff]
    %v965 = vld [vmem:[#allocation13 + $0x60] sm:$0xff]
    %v966 = vld [vmem:[#allocation13 + $0x68] sm:$0xff]
    %v967 = vld [vmem:[#allocation13 + $0x70] sm:$0xff]
    %v968 = vld [vmem:[#allocation13 + $0x78] sm:$0xff]
    %v969 = vld [vmem:[%s12] sm:$0x1]
    %v971 = vlaneseq
    %v972 = vshrl.u32 %v971, 7
    %v973 = vsub.s32 0, %v972
    %v974 = vrot.slane %v969, %v973
    %976 = vmatprep.subr.mxu0 0.0
    %977 = vmatpush1.msra.mxu0 %v953
    %978 = vmatprep.subr.mxu0 0.0
    %979 = vmatpush1.msra.mxu0 %v954
    %980 = vmatprep.subr.mxu0 0.0
    %981 = vmatpush1.msra.mxu0 %v955
    %982 = vmatprep.subr.mxu0 0.0
    %983 = vmatpush1.msra.mxu0 %v956
    %984 = vmatprep.subr.mxu0 0.0
    %985 = vmatpush1.msra.mxu0 %v957
    %986 = vmatprep.subr.mxu0 0.0
    %987 = vmatpush1.msra.mxu0 %v958
    %988 = vmatprep.subr.mxu0 0.0
    %989 = vmatpush1.msra.mxu0 %v959
    %990 = vmatprep.subr.mxu0 0.0
    %991 = vmatpush1.msra.mxu0 %v960
    %992 = vmatprep.subr.mxu0 0.0
    %993 = vmatpush1.msra.mxu0 %v961
    %994 = vmatprep.subr.mxu0 0.0
    %995 = vmatpush1.msra.mxu0 %v962
    %996 = vmatprep.subr.mxu0 0.0
    %997 = vmatpush1.msra.mxu0 %v963
    %998 = vmatprep.subr.mxu0 0.0
    %999 = vmatpush1.msra.mxu0 %v964
    %1000 = vmatprep.subr.mxu0 0.0
    %1001 = vmatpush1.msra.mxu0 %v965
    %1002 = vmatprep.subr.mxu0 0.0
    %1003 = vmatpush1.msra.mxu0 %v966
    %1004 = vmatprep.subr.mxu0 0.0
    %1005 = vmatpush1.msra.mxu0 %v967
    %1006 = vmatprep.subr.mxu0 0.0
    %1007 = vmatpush1.msra.mxu0 %v968
    %1008 = vmatprep.subr.mxu0 0.0
    %1009 = vmatpush1.msra.mxu0 0.0
    %1010 = vmatprep.subr.mxu0 0.0
    %1011 = vmatpush1.msra.mxu0 0.0
    %1012 = vmatprep.subr.mxu0 0.0
    %1013 = vmatpush1.msra.mxu0 0.0
    %1014 = vmatprep.subr.mxu0 0.0
    %1015 = vmatpush1.msra.mxu0 0.0
    %1016 = vmatprep.subr.mxu0 0.0
    %1017 = vmatpush1.msra.mxu0 0.0
    %1018 = vmatprep.subr.mxu0 0.0
    %1019 = vmatpush1.msra.mxu0 0.0
    %1020 = vmatprep.subr.mxu0 0.0
    %1021 = vmatpush1.msra.mxu0 0.0
    %1022 = vmatprep.subr.mxu0 0.0
    %1023 = vmatpush1.msra.mxu0 0.0
    %1024 = vmatprep.subr.mxu0 0.0
    %1025 = vmatpush1.msra.mxu0 0.0
    %1026 = vmatprep.subr.mxu0 0.0
    %1027 = vmatpush1.msra.mxu0 0.0
    %1028 = vmatprep.subr.mxu0 0.0
    %1029 = vmatpush1.msra.mxu0 0.0
    %1030 = vmatprep.subr.mxu0 0.0
    %1031 = vmatpush1.msra.mxu0 0.0
    %1032 = vmatprep.subr.mxu0 0.0
    %1033 = vmatpush1.msra.mxu0 0.0
    %1034 = vmatprep.subr.mxu0 0.0
    %1035 = vmatpush1.msra.mxu0 0.0
    %1036 = vmatprep.subr.mxu0 0.0
    %1037 = vmatpush1.msra.mxu0 0.0
    %1038 = vmatprep.subr.mxu0 0.0
    %1039 = vmatpush1.msra.mxu0 0.0
    %1040 = vmatprep.mubr.f32.mxu0 0.0
    %1041 = vmatmul.mubr.f32.gmra.mrb[0].mxu0 %v952
    %v1042 = vpop.f32.mrb[0].mxu0
    %v1043 = vadd.f32 %v974, %v1042
    %v1044 = vpop.f32.mrb[0].mxu0
    %1045 = vdwg.mxu0
    %1046 = vst [vmem:[#allocation14] sm:$0xff] %v1043
    // Predicated region
    $region82: #{tpu_custom_call.1} parent=1 // pred_check
      _
    $region83: #{tpu_custom_call.1} parent=1 // pred_check_branch
      %1048 = sbr.rel (0) target = $region85
    $region84: #{tpu_custom_call.1} parent=1 // pred_region
      %s1050 = ssub.s32 128, 128
      %1051 = vsyncadd [#allocation4], %s1050
      %s1053 = sshll.u32 [#allocation14], 4
      %s1054 = int_to_ptr.vmem [resolvable:$true] %s1053
      %1056 = dma.vmem_to_hbm [thread:$0]  %s1054, 128, %s13, [#allocation4]
    $region85: #{tpu_custom_call.1} parent=1 // pred_fallthru
      _
    // Predicated region
    $region86: #{tpu_custom_call.1} parent=1 // pred_check
      _
    $region87: #{tpu_custom_call.1} parent=1 // pred_check_branch
      %1058 = sbr.rel (0) target = $region89
    $region88: #{tpu_custom_call.1} parent=1 // pred_region
      %1059 = dma.done [#allocation4], 128
    $region89: #{tpu_custom_call.1} parent=1 // pred_fallthru
      _
    %1060 = vsyncpa [#allocation3], 1
    %1061 = vsyncpa [#allocation6], 1
    %1062 = vsyncpa [#allocation9], 1
    %1063 = vsyncpa [#allocation12], 1
    %1064 = vsyncpa [#allocation4], 1

</llo_original>
